<compile_context>
chip_gen: v7x
topology: tpu7x:2x2x1
jax: 0.10.0
libtpu: 0.0.40
codegen_flags: <defaults>
</compile_context>

<pallas_src>
import functools
import math

import jax
import jax.numpy as jnp
from jax.experimental import pallas as pl
from jax.experimental.pallas import tpu as pltpu

F32 = jnp.float32
BF16 = jnp.bfloat16
LN_EPS = 1e-12
_VMEM_LIMIT_BYTES = 48 * 1024 * 1024      # headroom even on v7x (64 MiB physical)


def _params(*sem):
    return pltpu.CompilerParams(dimension_semantics=sem,
                                vmem_limit_bytes=_VMEM_LIMIT_BYTES)


@functools.lru_cache(maxsize=None)
def _single_buffer_ok():
    """Probe whether BlockSpec(pipeline_mode=pl.Buffered(1)) works here."""
    try:
        def _k(w_ref, o_ref):
            o_ref[...] = w_ref[...] * 2.0
        w = jnp.ones((8, 128), F32)
        out = pl.pallas_call(
            _k,
            out_shape=jax.ShapeDtypeStruct((16, 128), F32),
            grid=(2,),
            in_specs=[pl.BlockSpec((8, 128), lambda i: (0, 0),
                                   pipeline_mode=pl.Buffered(buffer_count=1))],
            out_specs=pl.BlockSpec((8, 128), lambda i: (i, 0)),
        )(w)
        out = jax.block_until_ready(out)
        return bool(jnp.all(out == 2.0))
    except Exception:
        return False


def _resident_spec(a):
    """Weight/bias spec: constant block index; single-buffered when supported."""
    idx = (0,) * a.ndim
    if _single_buffer_ok():
        return pl.BlockSpec(a.shape, lambda i, _idx=idx: _idx,
                            pipeline_mode=pl.Buffered(buffer_count=1))
    return pl.BlockSpec(a.shape, lambda i, _idx=idx: _idx)


def _row_tile(m, cap=256):
    """Largest row tile <= cap dividing m; prefer >=4 grid steps for pipelining."""
    best = None
    for t in (256, 128, 64, 32, 16, 8):
        if t > cap or m % t:
            continue
        if best is None:
            best = t
        if m // t >= 4:
            return t
    return best if best is not None else m


def _layernorm(x, gamma, beta):
    mu = jnp.mean(x, axis=-1, keepdims=True)
    var = jnp.mean((x - mu) ** 2, axis=-1, keepdims=True)
    return (x - mu) * jax.lax.rsqrt(var + LN_EPS) * gamma + beta


# ----------------------------------------------------------------------------
# Row-tiled fused matmul (+ bias, + optional ReLU)
# ----------------------------------------------------------------------------
def _linear_kernel(act, x_ref, w_ref, b_ref, o_ref):
    y = jnp.dot(x_ref[...].astype(BF16), w_ref[...],
                preferred_element_type=jnp.float32) + b_ref[...]
    if act == "relu":
        y = jnp.maximum(y, 0.0)
    o_ref[...] = y.astype(o_ref.dtype)


def linear(x2d, w, b, act=None, out_dtype=BF16):
    m, kdim = x2d.shape
    n = w.shape[1]
    tm = _row_tile(m)
    b2 = b.reshape(1, n)
    row = lambda i: (i, 0)
    return pl.pallas_call(
        functools.partial(_linear_kernel, act),
        out_shape=jax.ShapeDtypeStruct((m, n), out_dtype),
        grid=(m // tm,),
        in_specs=[pl.BlockSpec((tm, kdim), row),
                  _resident_spec(w), _resident_spec(b2)],
        out_specs=pl.BlockSpec((tm, n), row),
        compiler_params=_params("parallel"),
    )(x2d, w, b2)


# ----------------------------------------------------------------------------
# Row-tiled residual-add + LayerNorm (embeddings)
# ----------------------------------------------------------------------------
def _add_ln_kernel(x_ref, r_ref, g_ref, b_ref, o_ref):
    x = x_ref[...].astype(F32) + r_ref[...].astype(F32)
    o_ref[...] = _layernorm(x, g_ref[...], b_ref[...]).astype(o_ref.dtype)


def add_layernorm(x2d, res2d, gamma, beta):
    m, n = x2d.shape
    tm = _row_tile(m)
    g2, b2 = gamma.reshape(1, n), beta.reshape(1, n)
    row = lambda i: (i, 0)
    return pl.pallas_call(
        _add_ln_kernel,
        out_shape=jax.ShapeDtypeStruct((m, n), BF16),
        grid=(m // tm,),
        in_specs=[pl.BlockSpec((tm, n), row), pl.BlockSpec((tm, n), row),
                  _resident_spec(g2), _resident_spec(b2)],
        out_specs=pl.BlockSpec((tm, n), row),
        compiler_params=_params("parallel"),
    )(x2d, res2d, g2, b2)


# ----------------------------------------------------------------------------
# Fused: projection matmul + bias + residual-add + LayerNorm
# ----------------------------------------------------------------------------
def _proj_add_ln_kernel(x_ref, w_ref, b_ref, r_ref, g_ref, bt_ref, o_ref):
    y = jnp.dot(x_ref[...].astype(BF16), w_ref[...],
                preferred_element_type=jnp.float32) + b_ref[...]
    y = y + r_ref[...].astype(F32)
    o_ref[...] = _layernorm(y, g_ref[...], bt_ref[...]).astype(o_ref.dtype)


def proj_add_layernorm(x2d, w, b, res2d, gamma, beta):
    m, kdim = x2d.shape
    n = w.shape[1]
    tm = _row_tile(m)
    b2, g2, bt2 = b.reshape(1, n), gamma.reshape(1, n), beta.reshape(1, n)
    row = lambda i: (i, 0)
    return pl.pallas_call(
        _proj_add_ln_kernel,
        out_shape=jax.ShapeDtypeStruct((m, n), BF16),
        grid=(m // tm,),
        in_specs=[pl.BlockSpec((tm, kdim), row), _resident_spec(w), _resident_spec(b2),
                  pl.BlockSpec((tm, n), row), _resident_spec(g2), _resident_spec(bt2)],
        out_specs=pl.BlockSpec((tm, n), row),
        compiler_params=_params("parallel"),
    )(x2d, w, b2, res2d, g2, bt2)


# ----------------------------------------------------------------------------
# Fused BERT FFN: x@W_in + b -> erf-GELU -> @W_out + b -> +residual -> LN
# ----------------------------------------------------------------------------
def _ffn_ln_kernel(x_ref, wi_ref, bi_ref, wo_ref, bo_ref, g_ref, bt_ref, o_ref):
    x = x_ref[...].astype(BF16)
    h = jnp.dot(x, wi_ref[...], preferred_element_type=jnp.float32) + bi_ref[...]
    h = jax.nn.gelu(h, approximate=False)            # erf-GELU (HF BERT), f32
    y = jnp.dot(h.astype(BF16), wo_ref[...],
                preferred_element_type=jnp.float32) + bo_ref[...]
    y = y + x.astype(F32)
    o_ref[...] = _layernorm(y, g_ref[...], bt_ref[...]).astype(o_ref.dtype)


def ffn_add_layernorm(x2d, w_in, b_in, w_out, b_out, gamma, beta):
    m, n = x2d.shape
    inter = w_in.shape[1]
    tm = _row_tile(m)
    bi2 = b_in.reshape(1, inter)
    bo2, g2, bt2 = b_out.reshape(1, n), gamma.reshape(1, n), beta.reshape(1, n)
    row = lambda i: (i, 0)
    return pl.pallas_call(
        _ffn_ln_kernel,
        out_shape=jax.ShapeDtypeStruct((m, n), BF16),
        grid=(m // tm,),
        in_specs=[pl.BlockSpec((tm, n), row), _resident_spec(w_in), _resident_spec(bi2),
                  _resident_spec(w_out), _resident_spec(bo2),
                  _resident_spec(g2), _resident_spec(bt2)],
        out_specs=pl.BlockSpec((tm, n), row),
        compiler_params=_params("parallel"),
    )(x2d, w_in, bi2, w_out, bo2, g2, bt2)


# ----------------------------------------------------------------------------
# Multi-head attention: static per-head lane slices of the QKV block, no
# split/merge-head transposes; 1/sqrt(dh) is folded into the Q projection.
# ----------------------------------------------------------------------------
def _attn_kernel(nh, dh, qkv_ref, m_ref, o_ref):
    bb = qkv_ref.shape[0]
    hd = nh * dh
    for bi in range(bb):
        qkv = qkv_ref[bi]                                    # [S, 3*hd] bf16
        bias = m_ref[bi]                                     # [1, S] f32 key mask
        for h in range(nh):
            q = qkv[:, h * dh:(h + 1) * dh]
            k = qkv[:, hd + h * dh:hd + (h + 1) * dh]
            v = qkv[:, 2 * hd + h * dh:2 * hd + (h + 1) * dh]
            s = jax.lax.dot_general(q, k, (((1,), (1,)), ((), ())),
                                    preferred_element_type=jnp.float32)
            s = s + bias
            s = s - jnp.max(s, axis=-1, keepdims=True)
            p = jnp.exp(s)
            p = p * pl.reciprocal(jnp.sum(p, axis=-1, keepdims=True), approx=True)
            ctx = jnp.dot(p.astype(BF16), v, preferred_element_type=jnp.float32)
            o_ref[bi, :, h * dh:(h + 1) * dh] = ctx.astype(o_ref.dtype)


def attention(qkv, mask_bias, nh, dh):
    b, l, three_hd = qkv.shape
    hd = nh * dh
    bb = 2 if b % 2 == 0 else 1            # 2 batch rows / grid step amortizes overhead
    return pl.pallas_call(
        functools.partial(_attn_kernel, nh, dh),
        out_shape=jax.ShapeDtypeStruct((b, l, hd), BF16),
        grid=(b // bb,),
        in_specs=[pl.BlockSpec((bb, l, three_hd), lambda i: (i, 0, 0)),
                  pl.BlockSpec((bb, 1, l), lambda i: (i, 0, 0))],
        out_specs=pl.BlockSpec((bb, l, hd), lambda i: (i, 0, 0)),
        compiler_params=_params("parallel"),
    )(qkv, mask_bias)


# ----------------------------------------------------------------------------
# Fused conv1 -> ReLU -> conv2 -> ReLU -> conv3 -> ReLU (kernel=3, padding=1)
# Intermediates stay in VMEM; time-padding done via a pre-zeroed VMEM scratch
# (no jnp.concatenate relayouts).
# ----------------------------------------------------------------------------
def _conv_stack_kernel(l_out, x_ref, w1_ref, b1_ref, w2_ref, b2_ref,
                       w3_ref, b3_ref, o_ref, pad_scr):
    c2_in = w2_ref.shape[1]
    c3_in = w3_ref.shape[1]

    def conv3_relu(xp, w_ref, b_ref):
        acc = jnp.dot(xp[0:l_out].astype(BF16), w_ref[0],
                      preferred_element_type=jnp.float32)
        acc = acc + jnp.dot(xp[1:l_out + 1].astype(BF16), w_ref[1],
                            preferred_element_type=jnp.float32)
        acc = acc + jnp.dot(xp[2:l_out + 2].astype(BF16), w_ref[2],
                            preferred_element_type=jnp.float32)
        return jnp.maximum(acc + b_ref[...], 0.0)

    zrow = jnp.zeros((1, pad_scr.shape[1]), F32)
    pad_scr[0:1, :] = zrow                                  # zero pad rows once
    pad_scr[l_out + 1:l_out + 2, :] = zrow

    y = conv3_relu(x_ref[0], w1_ref, b1_ref)                # [L, 384]
    pad_scr[1:l_out + 1, 0:c2_in] = y
    y = conv3_relu(pad_scr[:, 0:c2_in], w2_ref, b2_ref)     # [L, 256]
    pad_scr[1:l_out + 1, 0:c3_in] = y
    y = conv3_relu(pad_scr[:, 0:c3_in], w3_ref, b3_ref)     # [L, hidden]
    o_ref[0] = y.astype(o_ref.dtype)


def conv_stack(x, w1, b1, w2, b2, w3, b3):
    bsz, l, cin = x.shape
    cout = w3.shape[2]
    xp = jnp.pad(x, ((0, 0), (1, 1), (0, 0)))               # padding=1 on time axis
    b1r, b2r, b3r = b1.reshape(1, -1), b2.reshape(1, -1), b3.reshape(1, -1)
    pad_w = w2.shape[1]                                      # widest padded activation
    return pl.pallas_call(
        functools.partial(_conv_stack_kernel, l),
        out_shape=jax.ShapeDtypeStruct((bsz, l, cout), BF16),
        grid=(bsz,),
        in_specs=[pl.BlockSpec((1, l + 2, cin), lambda i: (i, 0, 0)),
                  _resident_spec(w1), _resident_spec(b1r),
                  _resident_spec(w2), _resident_spec(b2r),
                  _resident_spec(w3), _resident_spec(b3r)],
        out_specs=pl.BlockSpec((1, l, cout), lambda i: (i, 0, 0)),
        scratch_shapes=[pltpu.VMEM((l + 2, pad_w), F32)],
        compiler_params=_params("parallel"),
    )(xp, w1, b1r, w2, b2r, w3, b3r)


# ----------------------------------------------------------------------------
# Bidirectional LSTM layer: one grid step per direction (splits across the two
# TensorCores on v7x).  gx = x @ W_ih + b is hoisted out of the recurrence;
# h/c live in fori_loop carries (vregs); per-direction [H,4H] W_hh (no padded
# block-diagonal); the backward time reversal is folded into the index math.
# ----------------------------------------------------------------------------
def _lstm_dir_kernel(hdim, gx_ref, whh_ref, o_ref):
    seq, bsz, _ = gx_ref.shape
    d = pl.program_id(0)                              # 0 = forward, 1 = backward
    whh = whh_ref[0]                                  # [H, 4H] bf16

    def step(s, carry):
        h, c = carry
        t = s + d * (seq - 1 - 2 * s)                 # s (fwd)  /  seq-1-s (bwd)
        g = gx_ref[t].astype(F32) + jnp.dot(h.astype(BF16), whh,
                                            preferred_element_type=jnp.float32)
        i = jax.nn.sigmoid(g[:, 0:hdim])              # PyTorch gate order (i,f,g,o)
        f = jax.nn.sigmoid(g[:, hdim:2 * hdim])
        gg = jnp.tanh(g[:, 2 * hdim:3 * hdim])
        o = jax.nn.sigmoid(g[:, 3 * hdim:4 * hdim])
        c_new = f * c + i * gg
        h_new = o * jnp.tanh(c_new)
        o_ref[t] = h_new.astype(o_ref.dtype)
        return h_new, c_new

    h0 = jnp.zeros((bsz, hdim), F32)
    c0 = jnp.zeros((bsz, hdim), F32)
    jax.lax.fori_loop(0, seq, step, (h0, c0), unroll=2)


def bilstm_layer(gx, whh, hdim):
    # TODO(synk): for large B*L, stream gx / output in time chunks
    # (pltpu.emit_pipeline or manual DMA) instead of full-resident blocks.
    seq, bsz, _ = gx.shape
    return pl.pallas_call(
        functools.partial(_lstm_dir_kernel, hdim),
        out_shape=jax.ShapeDtypeStruct((seq, bsz, 2 * hdim), BF16),
        grid=(2,),
        in_specs=[pl.BlockSpec((seq, bsz, 4 * hdim), lambda d: (0, 0, d)),
                  pl.BlockSpec((1, hdim, 4 * hdim), lambda d: (d, 0, 0))],
        out_specs=pl.BlockSpec((seq, bsz, hdim), lambda d: (0, 0, d)),
        compiler_params=_params("parallel"),
    )(gx, whh)


def bilstm(x_tm, lstm_params, hdim):
    # x_tm: [L, B, In] time-major; 2 layers, inter-layer dropout -> identity.
    out = x_tm
    for p in lstm_params:
        seq, bsz, in_dim = out.shape
        gx = linear(out.reshape(seq * bsz, in_dim), p["wih"], p["b"])   # hoisted x@W_ih
        out = bilstm_layer(gx.reshape(seq, bsz, 8 * hdim), p["whh"], hdim)
    return out                                                           # [L, B, 2H]


# ----------------------------------------------------------------------------
# Fused classifier head: lin1 -> ReLU -> lin2 -> ReLU -> lin3 (padded to 128)
# ----------------------------------------------------------------------------
def _head_kernel(x_ref, w1_ref, b1_ref, w2_ref, b2_ref, w3_ref, b3_ref, o_ref):
    h1 = jnp.maximum(jnp.dot(x_ref[...].astype(BF16), w1_ref[...],
                             preferred_element_type=jnp.float32) + b1_ref[...], 0.0)
    h2 = jnp.maximum(jnp.dot(h1.astype(BF16), w2_ref[...],
                             preferred_element_type=jnp.float32) + b2_ref[...], 0.0)
    o_ref[...] = jnp.dot(h2.astype(BF16), w3_ref[...],
                         preferred_element_type=jnp.float32) + b3_ref[...]


def mlp_head(x2d, w1, b1, w2, b2, w3p, b3p):
    m, kdim = x2d.shape
    n = w3p.shape[1]                                         # 128 (lane-dense, padded)
    tm = _row_tile(m)
    b1r, b2r, b3r = b1.reshape(1, -1), b2.reshape(1, -1), b3p.reshape(1, -1)
    row = lambda i: (i, 0)
    return pl.pallas_call(
        _head_kernel,
        out_shape=jax.ShapeDtypeStruct((m, n), F32),
        grid=(m // tm,),
        in_specs=[pl.BlockSpec((tm, kdim), row),
                  _resident_spec(w1), _resident_spec(b1r),
                  _resident_spec(w2), _resident_spec(b2r),
                  _resident_spec(w3p), _resident_spec(b3r)],
        out_specs=pl.BlockSpec((tm, n), row),
        compiler_params=_params("parallel"),
    )(x2d, w1, b1r, w2, b2r, w3p, b3r)


# ----------------------------------------------------------------------------
# Synthetic (frozen) BERT encoder
# ----------------------------------------------------------------------------
def bert_layer_fwd(h2d, lp, mask_bias, b, l, nh, dh):
    hd = nh * dh
    qkv = linear(h2d, lp["w_qkv"], lp["b_qkv"])                        # fused QKV
    ctx = attention(qkv.reshape(b, l, 3 * hd), mask_bias, nh, dh)      # [B, L, hd]
    h2d = proj_add_layernorm(ctx.reshape(b * l, hd), lp["wo"], lp["bo"],
                             h2d, lp["ln1_g"], lp["ln1_b"])
    h2d = ffn_add_layernorm(h2d, lp["w_inter"], lp["b_inter"],
                            lp["w_out"], lp["b_out"], lp["ln2_g"], lp["ln2_b"])
    return h2d


def bert_forward(input_ids, mask, p, num_heads):
    b, l = input_ids.shape
    hd = p["word_emb"].shape[1]
    dh = hd // num_heads
    # TODO(synk): embedding row-gather stays in JAX glue (not a tiled hot path).
    word = jnp.take(p["word_emb"], input_ids, axis=0)                  # [B, L, hd]
    pos_typ = p["pos_emb"][:l][None, :, :] + p["type_emb"][0][None, None, :]
    pos_typ = jnp.broadcast_to(pos_typ, word.shape)
    h2d = add_layernorm(word.reshape(b * l, hd), pos_typ.reshape(b * l, hd),
                        p["emb_ln_g"], p["emb_ln_b"])                  # [B*L, hd] bf16
    mask_bias = ((1.0 - mask.astype(F32)) * -10000.0)[:, None, :]      # [B, 1, L]
    for lp in p["layers"]:
        h2d = bert_layer_fwd(h2d, lp, mask_bias, b, l, num_heads, dh)
    return h2d.reshape(b, l, hd)                                       # last_hidden_state


# ----------------------------------------------------------------------------
# Full classifier forward (eval mode: all dropouts are identity)
# ----------------------------------------------------------------------------
def lamp_forward(input_ids, mask, params):
    nh = params["num_heads"]
    hidden = params["hidden_size"]
    bert_out = bert_forward(input_ids, mask, params["bert"], nh)       # [B, L, 768]
    # PyTorch permutes to NCW for Conv1d; our conv kernel is channels-last, so
    # the two permute(0, 2, 1) calls cancel out here.
    x = conv_stack(bert_out,
                   params["conv1_w"], params["conv1_b"],
                   params["conv2_w"], params["conv2_b"],
                   params["conv3_w"], params["conv3_b"])               # [B, L, hidden]
    x_tm = jnp.transpose(x, (1, 0, 2))                                 # [L, B, hidden]
    lstm_out = bilstm(x_tm, params["lstm"], hidden)                    # [L, B, 2*hidden]
    seq, bsz, feat = lstm_out.shape
    logits = mlp_head(lstm_out.reshape(seq * bsz, feat),
                      params["lin1_w"], params["lin1_b"],
                      params["lin2_w"], params["lin2_b"],
                      params["lin3_w"], params["lin3_b"])              # [L*B, 128]
    logits = logits[:, :9].reshape(seq, bsz, 9)                        # un-pad lanes
    return jnp.transpose(logits, (1, 0, 2))                            # [B, L, 9]


# ----------------------------------------------------------------------------
# Deterministic synthetic parameter initialization
# ----------------------------------------------------------------------------
def init_params(key, *, vocab=69, max_pos=128, bert_hidden=768, num_layers=2,
                num_heads=12, intermediate=1024, hidden_size=256):
    # TODO(synk): real DNABERT (3-mer) checkpoint/config unavailable; synthetic
    # small config (2 layers, intermediate=1024) with hidden=768 to match conv1.
    keys = iter(jax.random.split(key, 64))

    def nrm(shape, scale=0.02):
        return scale * jax.random.normal(next(keys), shape, dtype=F32)

    def zeros(shape):
        return jnp.zeros(shape, F32)

    def ones(shape):
        return jnp.ones(shape, F32)

    dh = bert_hidden // num_heads
    q_scale = 1.0 / math.sqrt(dh)

    layers = []
    for _ in range(num_layers):
        # 1/sqrt(dh) folded into the Q projection (scale W_q and b_q when
        # loading a real checkpoint; biases are zero here).
        wq = nrm((bert_hidden, bert_hidden)) * q_scale
        wk, wv = nrm((bert_hidden, bert_hidden)), nrm((bert_hidden, bert_hidden))
        layers.append(dict(
            w_qkv=jnp.concatenate([wq, wk, wv], axis=1).astype(BF16),   # fused QKV
            b_qkv=zeros((3 * bert_hidden,)),
            wo=nrm((bert_hidden, bert_hidden)).astype(BF16),
            bo=zeros((bert_hidden,)),
            ln1_g=ones((bert_hidden,)), ln1_b=zeros((bert_hidden,)),
            w_inter=nrm((bert_hidden, intermediate)).astype(BF16),
            b_inter=zeros((intermediate,)),
            w_out=nrm((intermediate, bert_hidden)).astype(BF16),
            b_out=zeros((bert_hidden,)),
            ln2_g=ones((bert_hidden,)), ln2_b=zeros((bert_hidden,)),
        ))
    bert = dict(
        word_emb=nrm((vocab, bert_hidden)),
        pos_emb=nrm((max_pos, bert_hidden)),
        type_emb=nrm((2, bert_hidden)),
        emb_ln_g=ones((bert_hidden,)), emb_ln_b=zeros((bert_hidden,)),
        layers=layers,
    )

    lstm = []
    h = hidden_size
    for layer in range(2):
        in_dim = h if layer == 0 else 2 * h
        wih_f, wih_b = nrm((in_dim, 4 * h)), nrm((in_dim, 4 * h))
        whh_f, whh_b = nrm((h, 4 * h)), nrm((h, 4 * h))
        lstm.append(dict(
            wih=jnp.concatenate([wih_f, wih_b], axis=1).astype(BF16),  # [In, 8H] both dirs
            b=zeros((8 * h,)),                    # TODO(synk): real ckpt -> b_ih + b_hh
            whh=jnp.stack([whh_f, whh_b], axis=0).astype(BF16),        # [2, H, 4H]
        ))

    lin3_w = jnp.zeros((128, 128), F32).at[:, :9].set(nrm((128, 9)))   # pad N=9 -> 128 lanes
    return dict(
        num_heads=num_heads,
        hidden_size=hidden_size,
        bert=bert,
        lstm=lstm,
        # conv weights stored as [K, Cin, Cout] (PyTorch Conv1d weight is [Cout, Cin, K])
        conv1_w=nrm((3, bert_hidden, 384)).astype(BF16), conv1_b=zeros((384,)),
        conv2_w=nrm((3, 384, 256)).astype(BF16), conv2_b=zeros((256,)),
        conv3_w=nrm((3, 256, hidden_size)).astype(BF16), conv3_b=zeros((hidden_size,)),
        lin1_w=nrm((2 * hidden_size, 256)).astype(BF16), lin1_b=zeros((256,)),
        lin2_w=nrm((256, 128)).astype(BF16), lin2_b=zeros((128,)),
        lin3_w=lin3_w.astype(BF16), lin3_b=zeros((128,)),
    )


if __name__ == "__main__":
    key = jax.random.PRNGKey(0)
    pkey, dkey = jax.random.split(key)
    params = init_params(pkey)

    B, L = 2, 8
    input_ids = jax.random.randint(dkey, (B, L), 0, 69, dtype=jnp.int32)
    mask = jnp.ones((B, L), dtype=jnp.int32)

    out = lamp_forward(input_ids, mask, params)
    out = jax.block_until_ready(out)
    assert out.shape == (B, L, 9), out.shape
    assert bool(jnp.all(jnp.isfinite(out)))
    print("KERNEL_OK")
</pallas_src>

<mosaic_0001>
module attributes {stable_mosaic.version = 11 : i64} {
  func.func @_k(%arg0: i32, %arg1: memref<8x128xf32, #tpu.memory_space<vmem>>, %arg2: memref<8x128xf32, #tpu.memory_space<vmem>>) attributes {dimension_semantics = [#tpu.dimension_semantics<arbitrary>], iteration_bounds = array<i64: 2>, scalar_prefetch = 0 : i64, scratch_operands = 0 : i64, tpu.core_type = #tpu.core_type<tc>, window_params = [{pipeline_mode = #tpu.pipeline_mode<synchronous>, transform_indices = @transform_0, window_bounds = array<i64: 8, 128>}, {transform_indices = @transform_1, window_bounds = array<i64: 8, 128>}]} {
    %c0 = arith.constant 0 : index
    %c0_0 = arith.constant 0 : index
    %0 = vector.load %arg1[%c0, %c0_0] : memref<8x128xf32, #tpu.memory_space<vmem>>, vector<8x128xf32>
    %cst = arith.constant 2.000000e+00 : f32
    %1 = vector.broadcast %cst : f32 to vector<8x128xf32>
    %2 = arith.mulf %0, %1 : vector<8x128xf32>
    %c0_1 = arith.constant 0 : index
    %c0_2 = arith.constant 0 : index
    %3 = vector.load %arg2[%c0_1, %c0_2] : memref<8x128xf32, #tpu.memory_space<vmem>>, vector<8x128xf32>
    tpu.vector_store %arg2[%c0_1, %c0_2], %2 {strides = array<i32>} : memref<8x128xf32, #tpu.memory_space<vmem>>, vector<8x128xf32>,
    return
  }
  func.func @transform_0(%arg0: i32) -> (i32, i32) {
    %c0_i32 = arith.constant 0 : i32
    %c0_i32_0 = arith.constant 0 : i32
    %c0_i32_1 = arith.constant 0 : i32
    return %c0_i32, %c0_i32_0 : i32, i32
  }
  func.func @transform_1(%arg0: i32) -> (i32, i32) {
    %c0_i32 = arith.constant 0 : i32
    %c0_i32_0 = arith.constant 0 : i32
    return %arg0, %c0_i32 : i32, i32
  }
}

module attributes {stable_mosaic.version = 11 : i64} {
  func.func @_add_ln_kernel(%arg0: i32, %arg1: memref<16x768xf32, #tpu.memory_space<vmem>>, %arg2: memref<16x768xf32, #tpu.memory_space<vmem>>, %arg3: memref<1x768xf32, #tpu.memory_space<vmem>>, %arg4: memref<1x768xf32, #tpu.memory_space<vmem>>, %arg5: memref<16x768xbf16, #tpu.memory_space<vmem>>) attributes {dimension_semantics = [#tpu.dimension_semantics<parallel>], iteration_bounds = array<i64: 1>, scalar_prefetch = 0 : i64, scratch_operands = 0 : i64, tpu.core_type = #tpu.core_type<tc>, window_params = [{transform_indices = @transform_0, window_bounds = array<i64: 16, 768>}, {transform_indices = @transform_1, window_bounds = array<i64: 16, 768>}, {pipeline_mode = #tpu.pipeline_mode<synchronous>, transform_indices = @transform_2, window_bounds = array<i64: 1, 768>}, {pipeline_mode = #tpu.pipeline_mode<synchronous>, transform_indices = @transform_3, window_bounds = array<i64: 1, 768>}, {transform_indices = @transform_4, window_bounds = array<i64: 16, 768>}]} {
    %c0 = arith.constant 0 : index
    %c0_0 = arith.constant 0 : index
    %0 = vector.load %arg1[%c0, %c0_0] : memref<16x768xf32, #tpu.memory_space<vmem>>, vector<16x768xf32>
    %c0_1 = arith.constant 0 : index
    %c0_2 = arith.constant 0 : index
    %1 = vector.load %arg2[%c0_1, %c0_2] : memref<16x768xf32, #tpu.memory_space<vmem>>, vector<16x768xf32>
    %2 = arith.addf %0, %1 : vector<16x768xf32>
    %c0_3 = arith.constant 0 : index
    %c0_4 = arith.constant 0 : index
    %3 = vector.load %arg3[%c0_3, %c0_4] : memref<1x768xf32, #tpu.memory_space<vmem>>, vector<1x768xf32>
    %c0_5 = arith.constant 0 : index
    %c0_6 = arith.constant 0 : index
    %4 = vector.load %arg4[%c0_5, %c0_6] : memref<1x768xf32, #tpu.memory_space<vmem>>, vector<1x768xf32>
    %cst = arith.constant dense<0.000000e+00> : vector<16xf32>
    %5 = vector.multi_reduction <add>, %2, %cst [1] : vector<16x768xf32> to vector<16xf32>
    %6 = vector.shape_cast %5 : vector<16xf32> to vector<16x1xf32>
    %cst_7 = arith.constant 7.680000e+02 : f32
    %7 = vector.broadcast %cst_7 : f32 to vector<16x1xf32>
    %8 = arith.divf %6, %7 : vector<16x1xf32>
    %9 = vector.broadcast %8 : vector<16x1xf32> to vector<16x768xf32>
    %10 = arith.subf %2, %9 : vector<16x768xf32>
    %11 = arith.mulf %10, %10 : vector<16x768xf32>
    %cst_8 = arith.constant dense<0.000000e+00> : vector<16xf32>
    %12 = vector.multi_reduction <add>, %11, %cst_8 [1] : vector<16x768xf32> to vector<16xf32>
    %13 = vector.shape_cast %12 : vector<16xf32> to vector<16x1xf32>
    %cst_9 = arith.constant 7.680000e+02 : f32
    %14 = vector.broadcast %cst_9 : f32 to vector<16x1xf32>
    %15 = arith.divf %13, %14 : vector<16x1xf32>
    %16 = vector.broadcast %8 : vector<16x1xf32> to vector<16x768xf32>
    %17 = arith.subf %2, %16 : vector<16x768xf32>
    %cst_10 = arith.constant 9.99999996E-13 : f32
    %18 = vector.broadcast %cst_10 : f32 to vector<16x1xf32>
    %19 = arith.addf %15, %18 : vector<16x1xf32>
    %20 = math.rsqrt %19 : vector<16x1xf32>
    %21 = vector.broadcast %20 : vector<16x1xf32> to vector<16x768xf32>
    %22 = arith.mulf %17, %21 : vector<16x768xf32>
    %23 = vector.broadcast %3 : vector<1x768xf32> to vector<16x768xf32>
    %24 = arith.mulf %22, %23 : vector<16x768xf32>
    %25 = vector.broadcast %4 : vector<1x768xf32> to vector<16x768xf32>
    %26 = arith.addf %24, %25 : vector<16x768xf32>
    %27 = arith.truncf %26 : vector<16x768xf32> to vector<16x768xbf16>
    %c0_11 = arith.constant 0 : index
    %c0_12 = arith.constant 0 : index
    %28 = vector.load %arg5[%c0_11, %c0_12] : memref<16x768xbf16, #tpu.memory_space<vmem>>, vector<16x768xbf16>
    tpu.vector_store %arg5[%c0_11, %c0_12], %27 {strides = array<i32>} : memref<16x768xbf16, #tpu.memory_space<vmem>>, vector<16x768xbf16>,
    return
  }
  func.func @transform_0(%arg0: i32) -> (i32, i32) {
    %c0_i32 = arith.constant 0 : i32
    %c0_i32_0 = arith.constant 0 : i32
    return %arg0, %c0_i32 : i32, i32
  }
  func.func @transform_1(%arg0: i32) -> (i32, i32) {
    %c0_i32 = arith.constant 0 : i32
    %c0_i32_0 = arith.constant 0 : i32
    return %arg0, %c0_i32 : i32, i32
  }
  func.func @transform_2(%arg0: i32) -> (i32, i32) {
    %c0_i32 = arith.constant 0 : i32
    %c0_i32_0 = arith.constant 0 : i32
    %c0_i32_1 = arith.constant 0 : i32
    return %c0_i32, %c0_i32_0 : i32, i32
  }
  func.func @transform_3(%arg0: i32) -> (i32, i32) {
    %c0_i32 = arith.constant 0 : i32
    %c0_i32_0 = arith.constant 0 : i32
    %c0_i32_1 = arith.constant 0 : i32
    return %c0_i32, %c0_i32_0 : i32, i32
  }
  func.func @transform_4(%arg0: i32) -> (i32, i32) {
    %c0_i32 = arith.constant 0 : i32
    %c0_i32_0 = arith.constant 0 : i32
    return %arg0, %c0_i32 : i32, i32
  }
}

</mosaic_0001>

<llo_original>
// kernel: tpu_custom_call.1
$region0: #{tpu_custom_call.1}
  #allocation0 [shape = 'u32[]', space=smem, size = 0x4, offset = 0x4, fixed_abs, tag = 'smem constant byte address 0x4 - core index']
  #allocation1 [shape = 'u32[144,128]{1,0:T(1,128)}', space=vmem, size = 0x12000, scoped, tag = 'internal scratch']
  %s0 = inlined_call_operand.hbm [shape: f32[8,128], index: 0, kind: input, shape index: {}]
  %s1 = inlined_call_operand.hbm [shape: f32[16,128], index: 1, kind: output, shape index: {}]
  %s2 = sld [smem:[#allocation0]]
  $region41: #{tpu_custom_call.1} parent=0
    _
  %s4 = ssub.s32 1, %s2
  %s5 = scalar_select 0, %s4, %s2
  $region1: #{tpu_custom_call.1} parent=0
    #allocation2 [shape = 'u8[4096]{0}', space=vmem, size = 0x1000, scoped, tag = 'input window, operand 0, single buffered']
    #allocation3 [shape = 's32[2]{0}', space=sflag, size = 0x8, scoped, tag = 'scoped memory for tpu_custom_call.1']
    #allocation4 [shape = 's32[2]{0}', space=sflag, size = 0x8, scoped, tag = 'scoped memory for tpu_custom_call.1']
    #allocation5 [shape = 'u8[8192]{0}', space=vmem, size = 0x2000, scoped, tag = 'output window, operand 0']
    %6 = vsyncpa [#allocation3], 0
    %7 = vsyncpa [#allocation4], 0
    %s8 = scalar_lea.sflag [#allocation4], 1
    %9 = vsyncpa %s8, 0
    loop: start=0, step=1, limit=4
    $region2: #{tpu_custom_call.1} parent=1 // loop_pre_header
      _
    $region3: #{tpu_custom_call.1} parent=1 // loop_header
      %s11 = sphi 0, %s15
      %p12 = scmp.ge.s32.totalorder %s11, 4
      %s19 = sphi 0, %s19
      %s21 = sphi 0, %s19
      %s22 = sphi 0, %s21
      %s36 = sphi 0, %s22
      %s42 = sphi 0, %s44
      %s45 = sphi 0, %s42
      %s46 = sphi 0, %s45
      %s62 = sphi 0, %s46
    $region4: #{tpu_custom_call.1} parent=1 // loop_header_branch
      %14 = sbr.rel (%p12) target = $region8
    $region5: #{tpu_custom_call.1} parent=1 // loop_body
      %s16 = ssub.s32 %s11, 1
      %s17 = ssub.s32 %s11, 2
      %s18 = sadd.s32 %s11, 1
      %s20 = sadd.s32 %s19, 1
      %p23 = scmp.eq.s32.totalorder %s11, 1
      %p24 = scmp.ne.s32.totalorder %s19, %s21
      %p25 = scmp.eq.s32.totalorder %s11, 0
      %p26 = por %p24, %p25
      %p27 = scmp.ne.s32.totalorder %s19, %s21
      %p28 = scmp.eq.s32.totalorder %s16, 1
      %p29 = por %p27, %p28
      %p30 = scmp.ne.s32.totalorder %s21, %s22
      %p31 = scmp.eq.s32.totalorder %s16, 0
      %p32 = por %p30, %p31
      %p33 = scmp.ne.s32.totalorder %s21, %s22
      %p34 = scmp.eq.s32.totalorder %s17, 1
      %p35 = por %p33, %p34
      %p37 = scmp.ne.s32.totalorder %s22, %s36
      %p38 = scmp.eq.s32.totalorder %s17, 0
      %p39 = por %p37, %p38
      %s40 = ssub.s32 %s11, %s18
      %p41 = scmp.eq.s32.totalorder %s40, 0
      %s43 = sadd.s32 %s42, 1
      %s44 = scalar_select %p41, %s42, %s43
      %p47 = pneg %p41
      %p48 = scmp.eq.s32.totalorder %s11, 1
      %p49 = por %p47, %p48
      %p50 = scmp.ne.s32.totalorder %s42, %s45
      %p51 = scmp.eq.s32.totalorder %s11, 0
      %p52 = por %p50, %p51
      %p53 = scmp.ne.s32.totalorder %s42, %s45
      %p54 = scmp.eq.s32.totalorder %s16, 1
      %p55 = por %p53, %p54
      %p56 = scmp.ne.s32.totalorder %s45, %s46
      %p57 = scmp.eq.s32.totalorder %s16, 0
      %p58 = por %p56, %p57
      %p59 = scmp.ne.s32.totalorder %s45, %s46
      %p60 = scmp.eq.s32.totalorder %s17, 1
      %p61 = por %p59, %p60
      %p63 = scmp.ne.s32.totalorder %s46, %s62
      %p64 = scmp.eq.s32.totalorder %s17, 0
      %p65 = por %p63, %p64
      %p66 = scmp.le.s32.totalorder 1, %s11
      %p67 = scmp.lt.s32.totalorder %s11, 3
      %p68 = pnand %p66, %p67
      %p69 = pneg %p68
      // Predicated region
      $region9: #{tpu_custom_call.1} parent=5 // pred_check
        _
      $region10: #{tpu_custom_call.1} parent=5 // pred_check_branch
        %71 = sbr.rel (%p68) target = $region12
      $region11: #{tpu_custom_call.1} parent=5 // pred_region
        %s72 = ssub.s32 %s11, 1
        // Predicated region
        $region13: #{tpu_custom_call.1} parent=11 // pred_check
          %p73 = pneg %p32
        $region14: #{tpu_custom_call.1} parent=11 // pred_check_branch
          %75 = sbr.rel (%p73) target = $region16
        $region15: #{tpu_custom_call.1} parent=11 // pred_region
          %s77 = ssub.s32 128, 128
          %78 = vsyncadd [#allocation3], %s77
          %s80 = sshll.u32 [#allocation2], 4
          %s81 = int_to_ptr.vmem [resolvable:$true] %s80
          %83 = dma.hbm_to_vmem [thread:$0]  %s0, 128, %s81, [#allocation3]
        $region16: #{tpu_custom_call.1} parent=11 // pred_fallthru
          _
      $region12: #{tpu_custom_call.1} parent=5 // pred_fallthru
        _
      %p84 = scmp.lt.s32.totalorder %s11, 2
      // Predicated region
      $region17: #{tpu_custom_call.1} parent=5 // pred_check
        %p85 = pneg %p84
      $region18: #{tpu_custom_call.1} parent=5 // pred_check_branch
        %87 = sbr.rel (%p85) target = $region20
      $region19: #{tpu_custom_call.1} parent=5 // pred_region
        _
      $region20: #{tpu_custom_call.1} parent=5 // pred_fallthru
        _
      %p88 = scmp.le.s32.totalorder 1, %s11
      %p89 = scmp.lt.s32.totalorder %s11, 3
      %p90 = pnand %p88, %p89
      %p91 = pneg %p90
      // Predicated region
      $region21: #{tpu_custom_call.1} parent=5 // pred_check
        _
      $region22: #{tpu_custom_call.1} parent=5 // pred_check_branch
        %93 = sbr.rel (%p90) target = $region24
      $region23: #{tpu_custom_call.1} parent=5 // pred_region
        %s94 = ssub.s32 %s11, 1
        // Predicated region
        $region25: #{tpu_custom_call.1} parent=23 // pred_check
          %p95 = pneg %p32
        $region26: #{tpu_custom_call.1} parent=23 // pred_check_branch
          %97 = sbr.rel (%p95) target = $region28
        $region27: #{tpu_custom_call.1} parent=23 // pred_region
          %98 = dma.done [#allocation3], 128
        $region28: #{tpu_custom_call.1} parent=23 // pred_fallthru
          _
        %p99 = pneg %p32
        %p100 = pneg %p29
        %p101 = pneg %p58
        %p102 = pneg %p55
        %s103 = sand.u32 %s45, 1
        %s104 = scalar_lea.sflag [#allocation4], %s103
        %s105 = sand.u32 %s45, 1
        %s106 = smul.addr %s105, 8
        %s107 = scalar_lea.vmem [#allocation5], %s106
        %v108 = vld [vmem:[#allocation2] sm:$0xff]
        %v109 = vmul.f32 %v108, 2.0
        %110 = vst [vmem:[%s107] sm:$0xff] %v109
        %s111 = sand.u32 %s45, 1
        %s112 = scalar_lea.sflag [#allocation4], %s111
        %s113 = sand.u32 %s45, 1
        %s114 = smul.addr %s113, 8
        %s115 = scalar_lea.vmem [#allocation5], %s114
        // Predicated region
        $region29: #{tpu_custom_call.1} parent=23 // pred_check
          %p116 = pneg %p55
        $region30: #{tpu_custom_call.1} parent=23 // pred_check_branch
          %118 = sbr.rel (%p116) target = $region32
        $region31: #{tpu_custom_call.1} parent=23 // pred_region
          %s120 = ssub.s32 128, 128
          %121 = vsyncadd %s112, %s120
          %s122 = smul.addr %s16, 128
          %s123 = scalar_lea.hbm %s1, %s122
          %s125 = sshll.u32 %s115, 4
          %s126 = int_to_ptr.vmem [resolvable:$true] %s125
          %128 = dma.vmem_to_hbm [thread:$0]  %s126, 128, %s123, %s112
        $region32: #{tpu_custom_call.1} parent=23 // pred_fallthru
          _
      $region24: #{tpu_custom_call.1} parent=5 // pred_fallthru
        _
      %p129 = scmp.le.s32.totalorder 2, %s11
      // Predicated region
      $region33: #{tpu_custom_call.1} parent=5 // pred_check
        %p130 = pneg %p129
      $region34: #{tpu_custom_call.1} parent=5 // pred_check_branch
        %132 = sbr.rel (%p130) target = $region36
      $region35: #{tpu_custom_call.1} parent=5 // pred_region
        %s133 = ssub.s32 %s11, 2
        // Predicated region
        $region37: #{tpu_custom_call.1} parent=35 // pred_check
          %p134 = pneg %p61
        $region38: #{tpu_custom_call.1} parent=35 // pred_check_branch
          %136 = sbr.rel (%p134) target = $region40
        $region39: #{tpu_custom_call.1} parent=35 // pred_region
          %s137 = sand.u32 %s46, 1
          %s138 = scalar_lea.sflag [#allocation4], %s137
          %s139 = sand.u32 %s46, 1
          %s140 = smul.addr %s139, 8
          %s141 = scalar_lea.vmem [#allocation5], %s140
          %142 = dma.done %s138, 128
        $region40: #{tpu_custom_call.1} parent=35 // pred_fallthru
          _
      $region36: #{tpu_custom_call.1} parent=5 // pred_fallthru
        _
    $region6: #{tpu_custom_call.1} parent=1 // loop_footer
      %s15 = sadd.s32 1, %s11
    $region7: #{tpu_custom_call.1} parent=1 // loop_footer_branch
      %10 = sbr.rel target = $region3
    $region8: #{tpu_custom_call.1} parent=1 // loop_exit
      _
    %143 = vsyncpa [#allocation3], 1
    %s144 = scalar_lea.sflag [#allocation3], 1
    %145 = vsyncpa %s144, 1
    %146 = vsyncpa [#allocation4], 1
    %s147 = scalar_lea.sflag [#allocation4], 1
    %148 = vsyncpa %s147, 1

// kernel: tpu_custom_call.1
$region0: #{tpu_custom_call.1}
  #allocation0 [shape = 'u32[]', space=smem, size = 0x4, offset = 0x4, fixed_abs, tag = 'smem constant byte address 0x4 - core index']
  #allocation1 [shape = 'u32[144,128]{1,0:T(1,128)}', space=vmem, size = 0x12000, scoped, tag = 'internal scratch']
  %s0 = inlined_call_operand.hbm [shape: f32[16,768], index: 0, kind: input, shape index: {}]
  %s1 = inlined_call_operand.hbm [shape: f32[16,768], index: 1, kind: input, shape index: {}]
  %s2 = inlined_call_operand.vmem [shape: f32[1,768], index: 2, kind: input, shape index: {}]
  %s3 = inlined_call_operand.hbm [shape: f32[1,768], index: 3, kind: input, shape index: {}]
  %s4 = inlined_call_operand.hbm [shape: bf16[16,768], index: 4, kind: output, shape index: {}]
  %s5 = sld [smem:[#allocation0]]
  $region38: #{tpu_custom_call.1} parent=0
    _
  %s7 = ssub.s32 1, %s5
  %s8 = scalar_select 0, %s7, %s5
  $region1: #{tpu_custom_call.1} parent=0
    #allocation2 [shape = 'u8[49152]{0}', space=vmem, size = 0xc000, scoped, tag = 'input window, operand 0, single buffered']
    #allocation3 [shape = 's32[1]{0}', space=sflag, size = 0x4, scoped, tag = 'scoped memory for tpu_custom_call.1']
    #allocation4 [shape = 's32[1]{0}', space=sflag, size = 0x4, scoped, tag = 'scoped memory for tpu_custom_call.1']
    #allocation5 [shape = 'u8[49152]{0}', space=vmem, size = 0xc000, scoped, tag = 'input window, operand 1, single buffered']
    #allocation6 [shape = 's32[1]{0}', space=sflag, size = 0x4, scoped, tag = 'scoped memory for tpu_custom_call.1']
    #allocation7 [shape = 'u8[3072]{0}', space=vmem, size = 0xc00, scoped, tag = 'input window, operand 3, single buffered']
    #allocation8 [shape = 'u8[24576]{0}', space=vmem, size = 0x6000, scoped, tag = 'output window, operand 0, single buffered']
    %9 = vsyncpa [#allocation3], 0
    %10 = vsyncpa [#allocation6], 0
    %11 = vsyncpa [#allocation4], 0
    // Predicated region
    $region2: #{tpu_custom_call.1} parent=1 // pred_check
      _
    $region3: #{tpu_custom_call.1} parent=1 // pred_check_branch
      %13 = sbr.rel (0) target = $region5
    $region4: #{tpu_custom_call.1} parent=1 // pred_region
      %s15 = ssub.s32 1536, 1536
      %16 = vsyncadd [#allocation3], %s15
      %s17 = sshll.u32 [#allocation2], 4
      %s18 = int_to_ptr.vmem [resolvable:$true] %s17
      %23 = dma.hbm_to_vmem [thread:$0]  %s0, 1536, %s18, [#allocation3], 768, 768, 48
    $region5: #{tpu_custom_call.1} parent=1 // pred_fallthru
      _
    // Predicated region
    $region6: #{tpu_custom_call.1} parent=1 // pred_check
      _
    $region7: #{tpu_custom_call.1} parent=1 // pred_check_branch
      %25 = sbr.rel (0) target = $region9
    $region8: #{tpu_custom_call.1} parent=1 // pred_region
      %s27 = ssub.s32 1536, 1536
      %28 = vsyncadd [#allocation6], %s27
      %s29 = sshll.u32 [#allocation5], 4
      %s30 = int_to_ptr.vmem [resolvable:$true] %s29
      %35 = dma.hbm_to_vmem [thread:$0]  %s1, 1536, %s30, [#allocation6], 768, 768, 48
    $region9: #{tpu_custom_call.1} parent=1 // pred_fallthru
      _
    // Predicated region
    $region10: #{tpu_custom_call.1} parent=1 // pred_check
      _
    $region11: #{tpu_custom_call.1} parent=1 // pred_check_branch
      %37 = sbr.rel (0) target = $region13
    $region12: #{tpu_custom_call.1} parent=1 // pred_region
      _
    $region13: #{tpu_custom_call.1} parent=1 // pred_fallthru
      _
    // Predicated region
    $region14: #{tpu_custom_call.1} parent=1 // pred_check
      _
    $region15: #{tpu_custom_call.1} parent=1 // pred_check_branch
      %39 = sbr.rel (0) target = $region17
    $region16: #{tpu_custom_call.1} parent=1 // pred_region
      %s41 = ssub.s32 96, 96
      %42 = vsyncadd [#allocation6], %s41
      %s44 = sshll.u32 [#allocation7], 4
      %s45 = int_to_ptr.vmem [resolvable:$true] %s44
      %47 = dma.hbm_to_vmem [thread:$0]  %s3, 96, %s45, [#allocation6]
    $region17: #{tpu_custom_call.1} parent=1 // pred_fallthru
      _
    // Predicated region
    $region18: #{tpu_custom_call.1} parent=1 // pred_check
      _
    $region19: #{tpu_custom_call.1} parent=1 // pred_check_branch
      %49 = sbr.rel (0) target = $region21
    $region20: #{tpu_custom_call.1} parent=1 // pred_region
      %50 = dma.done [#allocation3], 1536
    $region21: #{tpu_custom_call.1} parent=1 // pred_fallthru
      _
    // Predicated region
    $region22: #{tpu_custom_call.1} parent=1 // pred_check
      _
    $region23: #{tpu_custom_call.1} parent=1 // pred_check_branch
      %52 = sbr.rel (0) target = $region25
    $region24: #{tpu_custom_call.1} parent=1 // pred_region
      %53 = dma.done [#allocation6], 1536
    $region25: #{tpu_custom_call.1} parent=1 // pred_fallthru
      _
    // Predicated region
    $region26: #{tpu_custom_call.1} parent=1 // pred_check
      _
    $region27: #{tpu_custom_call.1} parent=1 // pred_check_branch
      %55 = sbr.rel (0) target = $region29
    $region28: #{tpu_custom_call.1} parent=1 // pred_region
      %56 = dma.done [#allocation6], 96
    $region29: #{tpu_custom_call.1} parent=1 // pred_fallthru
      _
    %v57 = vld [vmem:[#allocation2] sm:$0xff]
    %v58 = vld [vmem:[#allocation2 + $0x8] sm:$0xff]
    %v59 = vld [vmem:[#allocation2 + $0x10] sm:$0xff]
    %v60 = vld [vmem:[#allocation2 + $0x18] sm:$0xff]
    %v61 = vld [vmem:[#allocation2 + $0x20] sm:$0xff]
    %v62 = vld [vmem:[#allocation2 + $0x28] sm:$0xff]
    %v63 = vld [vmem:[#allocation2 + $0x30] sm:$0xff]
    %v64 = vld [vmem:[#allocation2 + $0x38] sm:$0xff]
    %v65 = vld [vmem:[#allocation2 + $0x40] sm:$0xff]
    %v66 = vld [vmem:[#allocation2 + $0x48] sm:$0xff]
    %v67 = vld [vmem:[#allocation2 + $0x50] sm:$0xff]
    %v68 = vld [vmem:[#allocation2 + $0x58] sm:$0xff]
    %v69 = vld [vmem:[#allocation5] sm:$0xff]
    %v70 = vld [vmem:[#allocation5 + $0x8] sm:$0xff]
    %v71 = vld [vmem:[#allocation5 + $0x10] sm:$0xff]
    %v72 = vld [vmem:[#allocation5 + $0x18] sm:$0xff]
    %v73 = vld [vmem:[#allocation5 + $0x20] sm:$0xff]
    %v74 = vld [vmem:[#allocation5 + $0x28] sm:$0xff]
    %v75 = vld [vmem:[#allocation5 + $0x30] sm:$0xff]
    %v76 = vld [vmem:[#allocation5 + $0x38] sm:$0xff]
    %v77 = vld [vmem:[#allocation5 + $0x40] sm:$0xff]
    %v78 = vld [vmem:[#allocation5 + $0x48] sm:$0xff]
    %v79 = vld [vmem:[#allocation5 + $0x50] sm:$0xff]
    %v80 = vld [vmem:[#allocation5 + $0x58] sm:$0xff]
    %v81 = vadd.f32 %v57, %v69
    %v82 = vadd.f32 %v58, %v70
    %v83 = vadd.f32 %v59, %v71
    %v84 = vadd.f32 %v60, %v72
    %v85 = vadd.f32 %v61, %v73
    %v86 = vadd.f32 %v62, %v74
    %v87 = vadd.f32 %v63, %v75
    %v88 = vadd.f32 %v64, %v76
    %v89 = vadd.f32 %v65, %v77
    %v90 = vadd.f32 %v66, %v78
    %v91 = vadd.f32 %v67, %v79
    %v92 = vadd.f32 %v68, %v80
    %v93 = vld [vmem:[%s2] sm:$0x3f]
    %v94 = vld [vmem:[#allocation7] sm:$0x3f]
    %v95 = vadd.f32 %v81, %v82
    %v96 = vadd.f32 %v95, %v83
    %v97 = vadd.f32 %v96, %v84
    %v98 = vadd.f32 %v97, %v85
    %v99 = vadd.f32 %v98, %v86
    %100 = vadd.xlane.f32.xlu0 %v99
    %v101 = vpop.xlane.xlu0 %100
    %v102 = vadd.f32 %v87, %v88
    %v103 = vadd.f32 %v102, %v89
    %v104 = vadd.f32 %v103, %v90
    %v105 = vadd.f32 %v104, %v91
    %v106 = vadd.f32 %v105, %v92
    %107 = vadd.xlane.f32.xlu0 %v106
    %v108 = vpop.xlane.xlu0 %107
    %v109 = vrcp.pop 768.0
    %v110 = vmul.f32 %v101, %v109
    %v111 = vmul.f32 %v108, %v109
    %v112 = vsub.f32 %v81, %v110
    %v113 = vsub.f32 %v82, %v110
    %v114 = vsub.f32 %v83, %v110
    %v115 = vsub.f32 %v84, %v110
    %v116 = vsub.f32 %v85, %v110
    %v117 = vsub.f32 %v86, %v110
    %v118 = vsub.f32 %v87, %v111
    %v119 = vsub.f32 %v88, %v111
    %v120 = vsub.f32 %v89, %v111
    %v121 = vsub.f32 %v90, %v111
    %v122 = vsub.f32 %v91, %v111
    %v123 = vsub.f32 %v92, %v111
    %v124 = vmul.f32 %v112, %v112
    %v125 = vmul.f32 %v113, %v113
    %v126 = vmul.f32 %v114, %v114
    %v127 = vmul.f32 %v115, %v115
    %v128 = vmul.f32 %v116, %v116
    %v129 = vmul.f32 %v117, %v117
    %v130 = vmul.f32 %v118, %v118
    %v131 = vmul.f32 %v119, %v119
    %v132 = vmul.f32 %v120, %v120
    %v133 = vmul.f32 %v121, %v121
    %v134 = vmul.f32 %v122, %v122
    %v135 = vmul.f32 %v123, %v123
    %v136 = vadd.f32 %v124, %v125
    %v137 = vadd.f32 %v136, %v126
    %v138 = vadd.f32 %v137, %v127
    %v139 = vadd.f32 %v138, %v128
    %v140 = vadd.f32 %v139, %v129
    %141 = vadd.xlane.f32.xlu0 %v140
    %v142 = vpop.xlane.xlu0 %141
    %v143 = vadd.f32 %v130, %v131
    %v144 = vadd.f32 %v143, %v132
    %v145 = vadd.f32 %v144, %v133
    %v146 = vadd.f32 %v145, %v134
    %v147 = vadd.f32 %v146, %v135
    %148 = vadd.xlane.f32.xlu0 %v147
    %v149 = vpop.xlane.xlu0 %148
    %v150 = vmul.f32 %v142, %v109
    %v151 = vmul.f32 %v149, %v109
    %v152 = vadd.f32 %v150, 1e-12
    %v153 = vadd.f32 %v151, 1e-12
    %v154 = vrsqrt.pop %v152
    %v155 = vrsqrt.pop %v153
    %v156 = vmul.f32 %v112, %v154
    %v157 = vmul.f32 %v113, %v154
    %v158 = vmul.f32 %v114, %v154
    %v159 = vmul.f32 %v115, %v154
    %v160 = vmul.f32 %v116, %v154
    %v161 = vmul.f32 %v117, %v154
    %v162 = vmul.f32 %v118, %v155
    %v163 = vmul.f32 %v119, %v155
    %v164 = vmul.f32 %v120, %v155
    %v165 = vmul.f32 %v121, %v155
    %v166 = vmul.f32 %v122, %v155
    %v167 = vmul.f32 %v123, %v155
    %v169 = vlaneseq
    %v170 = vshrl.u32 %v169, 7
    %v171 = vsub.s32 0, %v170
    %v172 = vrot.slane %v93, %v171
    %v173 = vlaneseq
    %v174 = vshrl.u32 %v173, 7
    %v175 = vsub.s32 1, %v174
    %v176 = vrot.slane %v93, %v175
    %v177 = vlaneseq
    %v178 = vshrl.u32 %v177, 7
    %v179 = vsub.s32 2, %v178
    %v180 = vrot.slane %v93, %v179
    %v181 = vlaneseq
    %v182 = vshrl.u32 %v181, 7
    %v183 = vsub.s32 3, %v182
    %v184 = vrot.slane %v93, %v183
    %v185 = vlaneseq
    %v186 = vshrl.u32 %v185, 7
    %v187 = vsub.s32 4, %v186
    %v188 = vrot.slane %v93, %v187
    %v189 = vlaneseq
    %v190 = vshrl.u32 %v189, 7
    %v191 = vsub.s32 5, %v190
    %v192 = vrot.slane %v93, %v191
    %v199 = vmul.f32 %v156, %v172
    %v200 = vmul.f32 %v157, %v176
    %v201 = vmul.f32 %v158, %v180
    %v202 = vmul.f32 %v159, %v184
    %v203 = vmul.f32 %v160, %v188
    %v204 = vmul.f32 %v161, %v192
    %v205 = vmul.f32 %v162, %v172
    %v206 = vmul.f32 %v163, %v176
    %v207 = vmul.f32 %v164, %v180
    %v208 = vmul.f32 %v165, %v184
    %v209 = vmul.f32 %v166, %v188
    %v210 = vmul.f32 %v167, %v192
    %v212 = vlaneseq
    %v213 = vshrl.u32 %v212, 7
    %v214 = vsub.s32 0, %v213
    %v215 = vrot.slane %v94, %v214
    %v216 = vlaneseq
    %v217 = vshrl.u32 %v216, 7
    %v218 = vsub.s32 1, %v217
    %v219 = vrot.slane %v94, %v218
    %v220 = vlaneseq
    %v221 = vshrl.u32 %v220, 7
    %v222 = vsub.s32 2, %v221
    %v223 = vrot.slane %v94, %v222
    %v224 = vlaneseq
    %v225 = vshrl.u32 %v224, 7
    %v226 = vsub.s32 3, %v225
    %v227 = vrot.slane %v94, %v226
    %v228 = vlaneseq
    %v229 = vshrl.u32 %v228, 7
    %v230 = vsub.s32 4, %v229
    %v231 = vrot.slane %v94, %v230
    %v232 = vlaneseq
    %v233 = vshrl.u32 %v232, 7
    %v234 = vsub.s32 5, %v233
    %v235 = vrot.slane %v94, %v234
    %v242 = vadd.f32 %v199, %v215
    %v243 = vadd.f32 %v200, %v219
    %v244 = vadd.f32 %v201, %v223
    %v245 = vadd.f32 %v202, %v227
    %v246 = vadd.f32 %v203, %v231
    %v247 = vadd.f32 %v204, %v235
    %v248 = vadd.f32 %v205, %v215
    %v249 = vadd.f32 %v206, %v219
    %v250 = vadd.f32 %v207, %v223
    %v251 = vadd.f32 %v208, %v227
    %v252 = vadd.f32 %v209, %v231
    %v253 = vadd.f32 %v210, %v235
    %v254 = vpack.c.bf16 %v248, %v242
    %v255 = vpack.c.bf16 %v249, %v243
    %v256 = vpack.c.bf16 %v250, %v244
    %v257 = vpack.c.bf16 %v251, %v245
    %v258 = vpack.c.bf16 %v252, %v246
    %v259 = vpack.c.bf16 %v253, %v247
    %v266 = vunpack.c.l.b16 %v254
    %v267 = vunpack.c.l.b16 %v255
    %v268 = vunpack.c.l.b16 %v256
    %v269 = vunpack.c.l.b16 %v257
    %v270 = vunpack.c.l.b16 %v258
    %v271 = vunpack.c.l.b16 %v259
    %v272 = vunpack.c.h.b16 %v254
    %v273 = vunpack.c.h.b16 %v255
    %v274 = vunpack.c.h.b16 %v256
    %v275 = vunpack.c.h.b16 %v257
    %v276 = vunpack.c.h.b16 %v258
    %v277 = vunpack.c.h.b16 %v259
    %v278 = vpack.c.b16 %v267, %v266
    %v279 = vpack.c.b16 %v269, %v268
    %v280 = vpack.c.b16 %v271, %v270
    %v281 = vpack.c.b16 %v273, %v272
    %v282 = vpack.c.b16 %v275, %v274
    %v283 = vpack.c.b16 %v277, %v276
    %290 = vst [vmem:[#allocation8] sm:$0xff] %v278
    %291 = vst [vmem:[#allocation8 + $0x8] sm:$0xff] %v279
    %292 = vst [vmem:[#allocation8 + $0x10] sm:$0xff] %v280
    %293 = vst [vmem:[#allocation8 + $0x18] sm:$0xff] %v281
    %294 = vst [vmem:[#allocation8 + $0x20] sm:$0xff] %v282
    %295 = vst [vmem:[#allocation8 + $0x28] sm:$0xff] %v283
    // Predicated region
    $region30: #{tpu_custom_call.1} parent=1 // pred_check
      _
    $region31: #{tpu_custom_call.1} parent=1 // pred_check_branch
      %297 = sbr.rel (0) target = $region33
    $region32: #{tpu_custom_call.1} parent=1 // pred_region
      %s299 = ssub.s32 768, 768
      %300 = vsyncadd [#allocation4], %s299
      %s301 = sshll.u32 [#allocation8], 4
      %s302 = int_to_ptr.vmem [resolvable:$true] %s301
      %307 = dma.vmem_to_hbm [thread:$0]  %s302, 768, %s4, [#allocation4], 384, 384, 24
    $region33: #{tpu_custom_call.1} parent=1 // pred_fallthru
      _
    // Predicated region
    $region34: #{tpu_custom_call.1} parent=1 // pred_check
      _
    $region35: #{tpu_custom_call.1} parent=1 // pred_check_branch
      %309 = sbr.rel (0) target = $region37
    $region36: #{tpu_custom_call.1} parent=1 // pred_region
      %310 = dma.done [#allocation4], 768
    $region37: #{tpu_custom_call.1} parent=1 // pred_fallthru
      _
    %311 = vsyncpa [#allocation3], 1
    %312 = vsyncpa [#allocation6], 1
    %313 = vsyncpa [#allocation4], 1

</llo_original>
